<compile_context>
chip_gen: v7x
topology: tpu7x:2x2x1
jax: 0.10.0
libtpu: 0.0.40
codegen_flags: <defaults>
</compile_context>

<pallas_src>
import jax
import jax.numpy as jnp
import numpy as np
from jax import lax
from jax.experimental import pallas as pl
from jax.experimental.pallas import tpu as pltpu

# ---------------- problem sizes ----------------
B, C_IN, H, W = 2, 4, 16, 16
C_OUT = 8
NUM_CLASSES = 10
KH = KW = 3                      # 3x3 conv, padding=1 -> same spatial size
K_IM2COL = KH * KW * C_IN        # 36
HW = H * W                       # 256
LOGIT_LANES = 128                # lane-dense padded logits width


def _fused_kernel(p_ref, cw_ref, hp_ref, feat_ref, logit_ref):
    """Single invocation, whole batch.

    p_ref    : (K_IM2COL, B*HW)    im2col patches, lane-dense (B*HW last)
    cw_ref   : (C_OUT, K_IM2COL+1) flattened conv weight | conv bias column
    hp_ref   : (C_OUT+1, 128)      rows 0..7 = head W^T (padded), row 8 = head bias (padded)
    feat_ref : (B, C_OUT, HW)      backbone features (ReLU(conv)), NCHW-flat
    logit_ref: (B, 128)            logits padded to 128 lanes
    """
    patches = p_ref[...]                              # (36, 512)
    w_flat = cw_ref[:, 0:K_IM2COL]                    # (8, 36)
    bc = cw_ref[:, K_IM2COL:K_IM2COL + 1]             # (8, 1)

    # One fused MXU matmul for the whole conv over the whole batch: (8,36)x(36,512).
    feat = jnp.dot(w_flat, patches, preferred_element_type=jnp.float32)  # (8, 512)
    feat = jnp.maximum(feat + bc, 0.0)                                   # bias + ReLU

    wh = hp_ref[0:C_OUT, :]                           # (8, 128)  head W^T (zero-padded)
    bh = hp_ref[C_OUT:C_OUT + 1, :]                   # (1, 128)  head bias (zero-padded)

    inv_hw = 1.0 / HW
    logit_rows = []
    for b in range(B):                                # static Python loop (B=2)
        fb = feat[:, b * HW:(b + 1) * HW]             # (8, 256) lane-dense slab
        feat_ref[b] = fb                              # unmasked 128-lane stores
        # Global average pool over H*W (cross-lane reduce on XLU).
        pooled = jnp.sum(fb, axis=1, keepdims=True) * inv_hw        # (8, 1)
        # Head on VPU/XLU: broadcast-mul + sublane reduce.
        logit_rows.append(jnp.sum(pooled * wh, axis=0, keepdims=True) + bh)  # (1, 128)
    logit_ref[...] = jnp.concatenate(logit_rows, axis=0)             # (B, 128)


@jax.jit
def trained_model_forward(x_nchw, conv_w_oihw, conv_b, head_w, head_b):
    """Returns (logits, feature_maps) matching the PyTorch module semantics.

    x_nchw      : (B, C_IN, H, W)
    conv_w_oihw : (C_OUT, C_IN, KH, KW)   (PyTorch Conv2d layout)
    conv_b      : (C_OUT,)
    head_w      : (NUM_CLASSES, C_OUT)    (PyTorch Linear layout)
    head_b      : (NUM_CLASSES,)
    """
    # ---- wrapper-side layout work (tiny, fused under jit) ----
    x_pad = jnp.pad(x_nchw, ((0, 0), (0, 0), (1, 1), (1, 1)))          # padding=1
    # im2col: K index ordered (kh, kw, ci); N index ordered (b, h, w).
    taps = [x_pad[:, :, kh:kh + H, kw:kw + W] for kh in range(KH) for kw in range(KW)]
    patches = jnp.stack(taps, axis=0)                                  # (9, B, C_IN, H, W)
    patches = jnp.transpose(patches, (0, 2, 1, 3, 4))                  # (9, C_IN, B, H, W)
    patches = patches.reshape(K_IM2COL, B * HW)                        # (36, 512)

    # Conv weight flattened with matching (kh, kw, ci) ordering: OIHW -> O,KH,KW,I.
    w_flat = jnp.transpose(conv_w_oihw, (0, 2, 3, 1)).reshape(C_OUT, K_IM2COL)
    conv_params = jnp.concatenate(
        [w_flat, conv_b.reshape(C_OUT, 1).astype(jnp.float32)], axis=1)          # (8, 37)

    head_params = jnp.zeros((C_OUT + 1, LOGIT_LANES), jnp.float32)
    head_params = head_params.at[0:C_OUT, 0:NUM_CLASSES].set(jnp.transpose(head_w))
    head_params = head_params.at[C_OUT, 0:NUM_CLASSES].set(head_b)               # (9, 128)

    feat_flat, logits_pad = pl.pallas_call(
        _fused_kernel,
        out_shape=(
            jax.ShapeDtypeStruct((B, C_OUT, HW), jnp.float32),
            jax.ShapeDtypeStruct((B, LOGIT_LANES), jnp.float32),
        ),
        in_specs=[
            pl.BlockSpec(memory_space=pltpu.MemorySpace.VMEM),   # patches (72 KB)
            pl.BlockSpec(memory_space=pltpu.MemorySpace.VMEM),   # conv params
            pl.BlockSpec(memory_space=pltpu.MemorySpace.VMEM),   # head params
        ],
        out_specs=(
            pl.BlockSpec(memory_space=pltpu.MemorySpace.VMEM),
            pl.BlockSpec(memory_space=pltpu.MemorySpace.VMEM),
        ),
    )(patches, conv_params, head_params)

    logits = logits_pad[:, :NUM_CLASSES]
    # Feature map is already in NCHW-flattened orientation -> pure reshape, no transpose.
    feature_maps = feat_flat.reshape(B, C_OUT, H, W)
    return logits, feature_maps


def _reference_forward(x_nchw, conv_w_oihw, conv_b, head_w, head_b):
    """Pure-JAX reference (for correctness check only)."""
    y = lax.conv_general_dilated(
        x_nchw, conv_w_oihw,
        window_strides=(1, 1), padding=((1, 1), (1, 1)),
        dimension_numbers=("NCHW", "OIHW", "NCHW"),
    ) + conv_b[None, :, None, None]
    feat = jnp.maximum(y, 0.0)
    pooled = jnp.mean(feat, axis=(2, 3))                 # (B, C_OUT)
    logits = pooled @ head_w.T + head_b[None, :]
    return logits, feat


if __name__ == "__main__":
    key = jax.random.PRNGKey(0)
    k_x, k_cw, k_cb, k_hw, k_hb = jax.random.split(key, 5)

    x = jax.random.normal(k_x, (B, C_IN, H, W), dtype=jnp.float32)
    conv_w = jax.random.normal(k_cw, (C_OUT, C_IN, KH, KW), dtype=jnp.float32) * 0.1
    conv_b = jax.random.normal(k_cb, (C_OUT,), dtype=jnp.float32) * 0.1
    head_w = jax.random.normal(k_hw, (NUM_CLASSES, C_OUT), dtype=jnp.float32) * 0.1
    head_b = jax.random.normal(k_hb, (NUM_CLASSES,), dtype=jnp.float32) * 0.1

    logits, feature_maps = trained_model_forward(x, conv_w, conv_b, head_w, head_b)
    jax.block_until_ready(logits)
    jax.block_until_ready(feature_maps)

    ref_logits, ref_feat = _reference_forward(x, conv_w, conv_b, head_w, head_b)
    assert np.allclose(np.asarray(logits), np.asarray(ref_logits), atol=1e-4, rtol=1e-4)
    assert np.allclose(np.asarray(feature_maps), np.asarray(ref_feat), atol=1e-4, rtol=1e-4)

    print("KERNEL_OK")
</pallas_src>

<mosaic_0001>
module attributes {stable_mosaic.version = 11 : i64} {
  func.func @_fused_kernel(%arg0: memref<36x512xf32, #tpu.memory_space<vmem>>, %arg1: memref<8x37xf32, #tpu.memory_space<vmem>>, %arg2: memref<9x128xf32, #tpu.memory_space<vmem>>, %arg3: memref<2x8x256xf32, #tpu.memory_space<vmem>>, %arg4: memref<2x128xf32, #tpu.memory_space<vmem>>) attributes {dimension_semantics = [], scalar_prefetch = 0 : i64, scratch_operands = 0 : i64, tpu.core_type = #tpu.core_type<tc>} {
    %c0 = arith.constant 0 : index
    %c0_0 = arith.constant 0 : index
    %0 = vector.load %arg0[%c0, %c0_0] : memref<36x512xf32, #tpu.memory_space<vmem>>, vector<36x512xf32>
    %c0_1 = arith.constant 0 : index
    %c0_2 = arith.constant 0 : index
    %1 = vector.load %arg1[%c0_1, %c0_2] : memref<8x37xf32, #tpu.memory_space<vmem>>, vector<8x36xf32>
    %c0_3 = arith.constant 0 : index
    %c36 = arith.constant 36 : index
    %2 = vector.load %arg1[%c0_3, %c36] : memref<8x37xf32, #tpu.memory_space<vmem>>, vector<8x1xf32>
    %cst = arith.constant dense<0.000000e+00> : vector<8x512xf32>
    %3 = tpu.matmul %1, %0, %cst {dimension_numbers = #tpu.dot_dimension_numbers<[1], [0], [0], [1], [0, 0, 1, 1], [], []>} : vector<8x36xf32>, vector<36x512xf32>, vector<8x512xf32> -> vector<8x512xf32>
    %4 = vector.broadcast %2 : vector<8x1xf32> to vector<8x512xf32>
    %5 = arith.addf %3, %4 : vector<8x512xf32>
    %cst_4 = arith.constant 0.000000e+00 : f32
    %6 = vector.broadcast %cst_4 : f32 to vector<8x512xf32>
    %7 = arith.maximumf %5, %6 : vector<8x512xf32>
    %c0_5 = arith.constant 0 : index
    %c0_6 = arith.constant 0 : index
    %8 = vector.load %arg2[%c0_5, %c0_6] : memref<9x128xf32, #tpu.memory_space<vmem>>, vector<8x128xf32>
    %c8 = arith.constant 8 : index
    %c0_7 = arith.constant 0 : index
    %9 = vector.load %arg2[%c8, %c0_7] : memref<9x128xf32, #tpu.memory_space<vmem>>, vector<1x128xf32>
    %10 = vector.extract_strided_slice %7 {offsets = [0, 0], sizes = [8, 256], strides = [1, 1]} : vector<8x512xf32> to vector<8x256xf32>
    %c0_8 = arith.constant 0 : index
    %c0_9 = arith.constant 0 : index
    %c0_10 = arith.constant 0 : index
    %11 = vector.load %arg3[%c0_8, %c0_9, %c0_10] : memref<2x8x256xf32, #tpu.memory_space<vmem>>, vector<1x8x256xf32>
    %12 = vector.shape_cast %11 : vector<1x8x256xf32> to vector<8x256xf32>
    %13 = vector.shape_cast %10 : vector<8x256xf32> to vector<1x8x256xf32>
    tpu.vector_store %arg3[%c0_8, %c0_9, %c0_10], %13 {strides = array<i32>} : memref<2x8x256xf32, #tpu.memory_space<vmem>>, vector<1x8x256xf32>,
    %cst_11 = arith.constant dense<0.000000e+00> : vector<8xf32>
    %14 = vector.multi_reduction <add>, %10, %cst_11 [1] : vector<8x256xf32> to vector<8xf32>
    %15 = vector.shape_cast %14 : vector<8xf32> to vector<8x1xf32>
    %cst_12 = arith.constant 3.906250e-03 : f32
    %16 = vector.broadcast %cst_12 : f32 to vector<8x1xf32>
    %17 = arith.mulf %15, %16 : vector<8x1xf32>
    %18 = vector.broadcast %17 : vector<8x1xf32> to vector<8x128xf32>
    %19 = arith.mulf %18, %8 : vector<8x128xf32>
    %cst_13 = arith.constant dense<0.000000e+00> : vector<128xf32>
    %20 = vector.multi_reduction <add>, %19, %cst_13 [0] : vector<8x128xf32> to vector<128xf32>
    %21 = vector.shape_cast %20 : vector<128xf32> to vector<1x128xf32>
    %22 = arith.addf %21, %9 : vector<1x128xf32>
    %23 = vector.extract_strided_slice %7 {offsets = [0, 256], sizes = [8, 256], strides = [1, 1]} : vector<8x512xf32> to vector<8x256xf32>
    %c1 = arith.constant 1 : index
    %c0_14 = arith.constant 0 : index
    %c0_15 = arith.constant 0 : index
    %24 = vector.load %arg3[%c1, %c0_14, %c0_15] : memref<2x8x256xf32, #tpu.memory_space<vmem>>, vector<1x8x256xf32>
    %25 = vector.shape_cast %24 : vector<1x8x256xf32> to vector<8x256xf32>
    %26 = vector.shape_cast %23 : vector<8x256xf32> to vector<1x8x256xf32>
    tpu.vector_store %arg3[%c1, %c0_14, %c0_15], %26 {strides = array<i32>} : memref<2x8x256xf32, #tpu.memory_space<vmem>>, vector<1x8x256xf32>,
    %cst_16 = arith.constant dense<0.000000e+00> : vector<8xf32>
    %27 = vector.multi_reduction <add>, %23, %cst_16 [1] : vector<8x256xf32> to vector<8xf32>
    %28 = vector.shape_cast %27 : vector<8xf32> to vector<8x1xf32>
    %cst_17 = arith.constant 3.906250e-03 : f32
    %29 = vector.broadcast %cst_17 : f32 to vector<8x1xf32>
    %30 = arith.mulf %28, %29 : vector<8x1xf32>
    %31 = vector.broadcast %30 : vector<8x1xf32> to vector<8x128xf32>
    %32 = arith.mulf %31, %8 : vector<8x128xf32>
    %cst_18 = arith.constant dense<0.000000e+00> : vector<128xf32>
    %33 = vector.multi_reduction <add>, %32, %cst_18 [0] : vector<8x128xf32> to vector<128xf32>
    %34 = vector.shape_cast %33 : vector<128xf32> to vector<1x128xf32>
    %35 = arith.addf %34, %9 : vector<1x128xf32>
    %36 = tpu.concatenate %22, %35 in 0 : vector<1x128xf32>, vector<1x128xf32> -> vector<2x128xf32>
    %c0_19 = arith.constant 0 : index
    %c0_20 = arith.constant 0 : index
    %37 = vector.load %arg4[%c0_19, %c0_20] : memref<2x128xf32, #tpu.memory_space<vmem>>, vector<2x128xf32>
    tpu.vector_store %arg4[%c0_19, %c0_20], %36 {strides = array<i32>} : memref<2x128xf32, #tpu.memory_space<vmem>>, vector<2x128xf32>,
    return
  }
}

</mosaic_0001>

<llo_original>
// kernel: trained_model_forward.1
$region0: #{trained_model_forward.1}
  #allocation0 [shape = 'u32[]', space=smem, size = 0x4, offset = 0x4, fixed_abs, tag = 'smem constant byte address 0x4 - core index']
  #allocation1 [shape = 'u32[144,128]{1,0:T(1,128)}', space=vmem, size = 0x12000, scoped, tag = 'internal scratch']
  %s0 = inlined_call_operand.vmem [shape: f32[36,512], index: 0, kind: input, shape index: {}]
  %s1 = inlined_call_operand.vmem [shape: f32[8,37], index: 1, kind: input, shape index: {}]
  %s2 = inlined_call_operand.vmem [shape: f32[9,128], index: 2, kind: input, shape index: {}]
  %s3 = inlined_call_operand.vmem [shape: f32[2,8,256], index: 3, kind: output, shape index: {0}]
  %s4 = inlined_call_operand.hbm [shape: f32[2,128], index: 4, kind: output, shape index: {1}]
  %5 = xla_tuple %s3, %s4
  %s6 = sld [smem:[#allocation0]]
  $region30: #{trained_model_forward.1} parent=0
    _
  %s8 = ssub.s32 1, %s6
  %s9 = scalar_select 0, %s8, %s6
  $region1: #{trained_model_forward.1} parent=0
    #allocation2 [shape = 'u8[1024]{0}', space=vmem, size = 0x400, scoped, tag = 'output window, operand 1, single buffered']
    #allocation3 [shape = 's32[1]{0}', space=sflag, size = 0x4, scoped, tag = 'scoped memory for trained_model_forward.1']
    %10 = vsyncpa [#allocation3], 0
    // Predicated region
    $region2: #{trained_model_forward.1} parent=1 // pred_check
      _
    $region3: #{trained_model_forward.1} parent=1 // pred_check_branch
      %12 = sbr.rel (0) target = $region5
    $region4: #{trained_model_forward.1} parent=1 // pred_region
      _
    $region5: #{trained_model_forward.1} parent=1 // pred_fallthru
      _
    // Predicated region
    $region6: #{trained_model_forward.1} parent=1 // pred_check
      _
    $region7: #{trained_model_forward.1} parent=1 // pred_check_branch
      %14 = sbr.rel (0) target = $region9
    $region8: #{trained_model_forward.1} parent=1 // pred_region
      _
    $region9: #{trained_model_forward.1} parent=1 // pred_fallthru
      _
    // Predicated region
    $region10: #{trained_model_forward.1} parent=1 // pred_check
      _
    $region11: #{trained_model_forward.1} parent=1 // pred_check_branch
      %16 = sbr.rel (0) target = $region13
    $region12: #{trained_model_forward.1} parent=1 // pred_region
      _
    $region13: #{trained_model_forward.1} parent=1 // pred_fallthru
      _
    %v17 = vld [vmem:[%s0] sm:$0xff]
    %v18 = vld [vmem:[%s0 + $0x8] sm:$0xff]
    %v19 = vld [vmem:[%s0 + $0x10] sm:$0xff]
    %v20 = vld [vmem:[%s0 + $0x18] sm:$0xff]
    %v21 = vld [vmem:[%s0 + $0x20] sm:$0xff]
    %v22 = vld [vmem:[%s0 + $0x28] sm:$0xff]
    %v23 = vld [vmem:[%s0 + $0x30] sm:$0xff]
    %v24 = vld [vmem:[%s0 + $0x38] sm:$0xff]
    %v25 = vld [vmem:[%s0 + $0x40] sm:$0xff]
    %v26 = vld [vmem:[%s0 + $0x48] sm:$0xff]
    %v27 = vld [vmem:[%s0 + $0x50] sm:$0xff]
    %v28 = vld [vmem:[%s0 + $0x58] sm:$0xff]
    %v29 = vld [vmem:[%s0 + $0x60] sm:$0xff]
    %v30 = vld [vmem:[%s0 + $0x68] sm:$0xff]
    %v31 = vld [vmem:[%s0 + $0x70] sm:$0xff]
    %v32 = vld [vmem:[%s0 + $0x78] sm:$0xff]
    %v33 = vld [vmem:[%s0 + $0x80] sm:$0xf]
    %v34 = vld [vmem:[%s0 + $0x88] sm:$0xf]
    %v35 = vld [vmem:[%s0 + $0x90] sm:$0xf]
    %v36 = vld [vmem:[%s0 + $0x98] sm:$0xf]
    %v37 = vld [vmem:[%s1] sm:$0xff]
    %39 = vset.pattern.permute.xlu0 36
    %40 = vperm.xlu0 %39, %v37
    %v41 = vpop.permute.xlu0 %40
    %vm43 = vcmask 293888
    %v44 = vsel %vm43, %v37, 0
    %vm46 = vcmask 1043456
    %v48 = vsel %vm46, %v33, 0
    %v51 = vsel %vm46, %v34, 0
    %v54 = vsel %vm46, %v35, 0
    %v57 = vsel %vm46, %v36, 0
    %59 = vmatprep.subr.mxu0 %v18
    %60 = vmatpush1.msra.mxu0 %v17
    %61 = vmatprep.subr.mxu0 %v22
    %62 = vmatpush1.msra.mxu0 %v21
    %63 = vmatprep.subr.mxu0 %v26
    %64 = vmatpush1.msra.mxu0 %v25
    %65 = vmatprep.subr.mxu0 %v30
    %66 = vmatpush1.msra.mxu0 %v29
    %67 = vmatprep.subr.mxu0 %v51
    %68 = vmatpush1.msra.mxu0 %v48
    %69 = vmatprep.subr.mxu0 0.0
    %70 = vmatpush1.msra.mxu0 0.0
    %71 = vmatprep.subr.mxu0 0.0
    %72 = vmatpush1.msra.mxu0 0.0
    %73 = vmatprep.subr.mxu0 0.0
    %74 = vmatpush1.msra.mxu0 0.0
    %75 = vmatprep.subr.mxu0 0.0
    %76 = vmatpush1.msra.mxu0 0.0
    %77 = vmatprep.subr.mxu0 0.0
    %78 = vmatpush1.msra.mxu0 0.0
    %79 = vmatprep.subr.mxu0 0.0
    %80 = vmatpush1.msra.mxu0 0.0
    %81 = vmatprep.subr.mxu0 0.0
    %82 = vmatpush1.msra.mxu0 0.0
    %83 = vmatprep.subr.mxu0 0.0
    %84 = vmatpush1.msra.mxu0 0.0
    %85 = vmatprep.subr.mxu0 0.0
    %86 = vmatpush1.msra.mxu0 0.0
    %87 = vmatprep.subr.mxu0 0.0
    %88 = vmatpush1.msra.mxu0 0.0
    %89 = vmatprep.subr.mxu0 0.0
    %90 = vmatpush1.msra.mxu0 0.0
    %91 = vmatprep.subr.mxu0 0.0
    %92 = vmatpush1.msra.mxu0 0.0
    %93 = vmatprep.subr.mxu0 0.0
    %94 = vmatpush1.msra.mxu0 0.0
    %95 = vmatprep.subr.mxu0 0.0
    %96 = vmatpush1.msra.mxu0 0.0
    %97 = vmatprep.subr.mxu0 0.0
    %98 = vmatpush1.msra.mxu0 0.0
    %99 = vmatprep.subr.mxu0 0.0
    %100 = vmatpush1.msra.mxu0 0.0
    %101 = vmatprep.subr.mxu0 0.0
    %102 = vmatpush1.msra.mxu0 0.0
    %103 = vmatprep.subr.mxu0 0.0
    %104 = vmatpush1.msra.mxu0 0.0
    %105 = vmatprep.subr.mxu0 0.0
    %106 = vmatpush1.msra.mxu0 0.0
    %107 = vmatprep.subr.mxu0 0.0
    %108 = vmatpush1.msra.mxu0 0.0
    %109 = vmatprep.subr.mxu0 0.0
    %110 = vmatpush1.msra.mxu0 0.0
    %111 = vmatprep.subr.mxu0 0.0
    %112 = vmatpush1.msra.mxu0 0.0
    %113 = vmatprep.subr.mxu0 0.0
    %114 = vmatpush1.msra.mxu0 0.0
    %115 = vmatprep.subr.mxu0 0.0
    %116 = vmatpush1.msra.mxu0 0.0
    %117 = vmatprep.subr.mxu0 0.0
    %118 = vmatpush1.msra.mxu0 0.0
    %119 = vmatprep.subr.mxu0 0.0
    %120 = vmatpush1.msra.mxu0 0.0
    %121 = vmatprep.subr.mxu0 0.0
    %122 = vmatpush1.msra.mxu0 0.0
    %123 = vmatprep.mubr.f32.mxu0 0.0
    %124 = vmatmul.mubr.f32.gmra.mrb[0].mxu0 %v44
    %v125 = vpop.f32.mrb[0].mxu0
    %v126 = vadd.f32 %v41, %v125
    %v127 = vpop.f32.mrb[0].mxu0
    %v128 = vadd.f32 %v41, %v127
    %129 = vdwg.mxu0
    %130 = vmatprep.subr.mxu0 %v20
    %131 = vmatpush1.msra.mxu0 %v19
    %132 = vmatprep.subr.mxu0 %v24
    %133 = vmatpush1.msra.mxu0 %v23
    %134 = vmatprep.subr.mxu0 %v28
    %135 = vmatpush1.msra.mxu0 %v27
    %136 = vmatprep.subr.mxu0 %v32
    %137 = vmatpush1.msra.mxu0 %v31
    %138 = vmatprep.subr.mxu0 %v57
    %139 = vmatpush1.msra.mxu0 %v54
    %140 = vmatprep.subr.mxu0 0.0
    %141 = vmatpush1.msra.mxu0 0.0
    %142 = vmatprep.subr.mxu0 0.0
    %143 = vmatpush1.msra.mxu0 0.0
    %144 = vmatprep.subr.mxu0 0.0
    %145 = vmatpush1.msra.mxu0 0.0
    %146 = vmatprep.subr.mxu0 0.0
    %147 = vmatpush1.msra.mxu0 0.0
    %148 = vmatprep.subr.mxu0 0.0
    %149 = vmatpush1.msra.mxu0 0.0
    %150 = vmatprep.subr.mxu0 0.0
    %151 = vmatpush1.msra.mxu0 0.0
    %152 = vmatprep.subr.mxu0 0.0
    %153 = vmatpush1.msra.mxu0 0.0
    %154 = vmatprep.subr.mxu0 0.0
    %155 = vmatpush1.msra.mxu0 0.0
    %156 = vmatprep.subr.mxu0 0.0
    %157 = vmatpush1.msra.mxu0 0.0
    %158 = vmatprep.subr.mxu0 0.0
    %159 = vmatpush1.msra.mxu0 0.0
    %160 = vmatprep.subr.mxu0 0.0
    %161 = vmatpush1.msra.mxu0 0.0
    %162 = vmatprep.subr.mxu0 0.0
    %163 = vmatpush1.msra.mxu0 0.0
    %164 = vmatprep.subr.mxu0 0.0
    %165 = vmatpush1.msra.mxu0 0.0
    %166 = vmatprep.subr.mxu0 0.0
    %167 = vmatpush1.msra.mxu0 0.0
    %168 = vmatprep.subr.mxu0 0.0
    %169 = vmatpush1.msra.mxu0 0.0
    %170 = vmatprep.subr.mxu0 0.0
    %171 = vmatpush1.msra.mxu0 0.0
    %172 = vmatprep.subr.mxu0 0.0
    %173 = vmatpush1.msra.mxu0 0.0
    %174 = vmatprep.subr.mxu0 0.0
    %175 = vmatpush1.msra.mxu0 0.0
    %176 = vmatprep.subr.mxu0 0.0
    %177 = vmatpush1.msra.mxu0 0.0
    %178 = vmatprep.subr.mxu0 0.0
    %179 = vmatpush1.msra.mxu0 0.0
    %180 = vmatprep.subr.mxu0 0.0
    %181 = vmatpush1.msra.mxu0 0.0
    %182 = vmatprep.subr.mxu0 0.0
    %183 = vmatpush1.msra.mxu0 0.0
    %184 = vmatprep.subr.mxu0 0.0
    %185 = vmatpush1.msra.mxu0 0.0
    %186 = vmatprep.subr.mxu0 0.0
    %187 = vmatpush1.msra.mxu0 0.0
    %188 = vmatprep.subr.mxu0 0.0
    %189 = vmatpush1.msra.mxu0 0.0
    %190 = vmatprep.subr.mxu0 0.0
    %191 = vmatpush1.msra.mxu0 0.0
    %192 = vmatprep.subr.mxu0 0.0
    %193 = vmatpush1.msra.mxu0 0.0
    %194 = vmatprep.mubr.f32.mxu0 0.0
    %195 = vmatmul.mubr.f32.gmra.mrb[0].mxu0 %v44
    %v196 = vpop.f32.mrb[0].mxu0
    %v197 = vadd.f32 %v41, %v196
    %v198 = vpop.f32.mrb[0].mxu0
    %v199 = vadd.f32 %v41, %v198
    %200 = vdwg.mxu0
    %v201 = vmax.f32 %v126, 0.0
    %v202 = vmax.f32 %v128, 0.0
    %v203 = vmax.f32 %v197, 0.0
    %v204 = vmax.f32 %v199, 0.0
    %v205 = vld [vmem:[%s2] sm:$0xff]
    %v206 = vld [vmem:[%s2 + $0x8] sm:$0x1]
    %207 = vst [vmem:[%s3] sm:$0xff] %v201
    %208 = vst [vmem:[%s3 + $0x8] sm:$0xff] %v202
    %v209 = vadd.f32 %v201, %v202
    %210 = vadd.xlane.f32.xlu0 %v209
    %v211 = vpop.xlane.xlu0 %210
    %v212 = vmul.f32 %v211, 0.00390625
    %v213 = vmul.f32 %v212, %v205
    %v214 = vrot.slane %v213, 4
    %v215 = vadd.f32 %v213, %v214
    %v216 = vrot.slane %v215, 2
    %v217 = vadd.f32 %v215, %v216
    %v218 = vrot.slane %v217, 1
    %v219 = vadd.f32 %v217, %v218
    %v220 = vadd.f32 %v219, %v206
    %s221 = scalar_lea.vmem %s3, 16
    %222 = vst [vmem:[%s221] sm:$0xff] %v203
    %223 = vst [vmem:[%s221 + $0x8] sm:$0xff] %v204
    %v224 = vadd.f32 %v203, %v204
    %225 = vadd.xlane.f32.xlu0 %v224
    %v226 = vpop.xlane.xlu0 %225
    %v227 = vmul.f32 %v226, 0.00390625
    %v228 = vmul.f32 %v227, %v205
    %v229 = vrot.slane %v228, 4
    %v230 = vadd.f32 %v228, %v229
    %v231 = vrot.slane %v230, 2
    %v232 = vadd.f32 %v230, %v231
    %v233 = vrot.slane %v232, 1
    %v234 = vadd.f32 %v232, %v233
    %v235 = vadd.f32 %v234, %v206
    %v237 = vrot.slane %v235, 7
    %vm239 = vcmask 1040384
    %v240 = vsel %vm239, %v220, %v237
    %241 = vst [vmem:[#allocation2] sm:$0x3] %v240
    // Predicated region
    $region14: #{trained_model_forward.1} parent=1 // pred_check
      _
    $region15: #{trained_model_forward.1} parent=1 // pred_check_branch
      %243 = sbr.rel (0) target = $region17
    $region16: #{trained_model_forward.1} parent=1 // pred_region
      _
    $region17: #{trained_model_forward.1} parent=1 // pred_fallthru
      _
    // Predicated region
    $region18: #{trained_model_forward.1} parent=1 // pred_check
      _
    $region19: #{trained_model_forward.1} parent=1 // pred_check_branch
      %245 = sbr.rel (0) target = $region21
    $region20: #{trained_model_forward.1} parent=1 // pred_region
      %s247 = ssub.s32 32, 32
      %248 = vsyncadd [#allocation3], %s247
      %s250 = sshll.u32 [#allocation2], 4
      %s251 = int_to_ptr.vmem [resolvable:$true] %s250
      %253 = dma.vmem_to_hbm [thread:$0]  %s251, 32, %s4, [#allocation3]
    $region21: #{trained_model_forward.1} parent=1 // pred_fallthru
      _
    // Predicated region
    $region22: #{trained_model_forward.1} parent=1 // pred_check
      _
    $region23: #{trained_model_forward.1} parent=1 // pred_check_branch
      %255 = sbr.rel (0) target = $region25
    $region24: #{trained_model_forward.1} parent=1 // pred_region
      _
    $region25: #{trained_model_forward.1} parent=1 // pred_fallthru
      _
    // Predicated region
    $region26: #{trained_model_forward.1} parent=1 // pred_check
      _
    $region27: #{trained_model_forward.1} parent=1 // pred_check_branch
      %257 = sbr.rel (0) target = $region29
    $region28: #{trained_model_forward.1} parent=1 // pred_region
      %258 = dma.done [#allocation3], 32
    $region29: #{trained_model_forward.1} parent=1 // pred_fallthru
      _
    %259 = vsyncpa [#allocation3], 1

</llo_original>
